<compile_context>
chip_gen: v5e
topology: v5e:2x2
jax: 0.10.0
libtpu: 0.0.40
codegen_flags: <defaults>
</compile_context>

<pallas_src>
import functools

import jax
import jax.numpy as jnp
from jax.experimental import pallas as pl
from jax.experimental.pallas import tpu as pltpu


def _leaky_relu(v, negative_slope=0.1):
    return jnp.where(v >= 0, v, negative_slope * v)


def large_block_kernel(x_ref,
                       w1_ref, b1_ref,
                       w2_ref, b2_ref,
                       w3_ref, b3_ref,
                       w4_ref, b4_ref,
                       w5_ref, b5_ref,
                       out_ref):
    # x_ref: (nInput, TB)   batch on the lane axis
    # wN_ref: (out, in)     PyTorch-native layout
    # bN_ref: (out, 1)      broadcasts across the batch/lane axis
    h = x_ref[...]
    h = _leaky_relu(
        jnp.dot(w1_ref[...], h, preferred_element_type=jnp.float32) + b1_ref[...])
    h = _leaky_relu(
        jnp.dot(w2_ref[...], h, preferred_element_type=jnp.float32) + b2_ref[...])
    h = _leaky_relu(
        jnp.dot(w3_ref[...], h, preferred_element_type=jnp.float32) + b3_ref[...])
    h = _leaky_relu(
        jnp.dot(w4_ref[...], h, preferred_element_type=jnp.float32) + b4_ref[...])
    # fc5: (10 -> 1).  Keep it off the MXU: VPU broadcast-multiply + sublane reduce.
    # w5_ref: (10, 1), b5_ref: (1, 1)
    y = jnp.sum(h * w5_ref[...], axis=0, keepdims=True) + b5_ref[...]   # (1, TB)
    y = _leaky_relu(y)
    out_ref[0] = y.astype(out_ref.dtype)


@functools.partial(jax.jit, static_argnames=("tb",))
def large_block_forward(x, params, *, tb=256):
    """x: (B, nInput) float32; params: list of (W, b) with W:(in,out), b:(1,out)."""
    B, n_in = x.shape
    num_tiles = pl.cdiv(B, tb)
    b_pad = num_tiles * tb

    # Batch on the lane axis, zero-padded ragged tail (sliced off below).
    x_t = jnp.pad(x, ((0, b_pad - B), (0, 0))).T          # (nInput, B_pad)

    (w1, b1), (w2, b2), (w3, b3), (w4, b4), (w5, b5) = params
    flat = [x_t,
            w1.T, b1.T,        # (100, nIn), (100, 1)
            w2.T, b2.T,        # (50, 100),  (50, 1)
            w3.T, b3.T,        # (25, 50),   (25, 1)
            w4.T, b4.T,        # (10, 25),   (10, 1)
            w5, b5.T]          # (10, 1),    (1, 1)   -- VPU path for fc5

    def const_spec(a):
        # Full-array block, same block every grid step -> stays VMEM-resident.
        return pl.BlockSpec(a.shape, lambda i: (0,) * a.ndim)

    in_specs = [pl.BlockSpec((n_in, tb), lambda i: (0, i))]
    in_specs += [const_spec(a) for a in flat[1:]]

    flops = 2 * b_pad * (n_in * 100 + 100 * 50 + 50 * 25 + 25 * 10 + 10 * 1)
    bytes_accessed = sum(int(a.size) * a.dtype.itemsize for a in flat) + b_pad * 4

    out = pl.pallas_call(
        large_block_kernel,
        out_shape=jax.ShapeDtypeStruct((num_tiles, 1, tb), jnp.float32),
        grid=(num_tiles,),
        in_specs=in_specs,
        # (1, 1, TB) output tile: last two dims (1, TB) are full-dim / 128-aligned,
        # lane-dense along the batch tile -> unmasked stores.
        out_specs=pl.BlockSpec((1, 1, tb), lambda i: (i, 0, 0)),
        compiler_params=pltpu.CompilerParams(
            dimension_semantics=("parallel",)),
        cost_estimate=pl.CostEstimate(
            flops=flops, transcendentals=0, bytes_accessed=bytes_accessed),
    )(*flat)

    return out.reshape(b_pad, 1)[:B]                       # (B, 1)


def init_params(key, n_input):
    """Deterministic init mimicking nn.Linear default (uniform +/- 1/sqrt(fan_in))."""
    dims = [n_input, 100, 50, 25, 10, 1]
    params = []
    for i in range(5):
        fan_in, fan_out = dims[i], dims[i + 1]
        key, kw, kb = jax.random.split(key, 3)
        bound = 1.0 / jnp.sqrt(fan_in)
        w = jax.random.uniform(kw, (fan_in, fan_out), jnp.float32, -bound, bound)
        b = jax.random.uniform(kb, (1, fan_out), jnp.float32, -bound, bound)
        params.append((w, b))
    return params


def reference_forward(x, params):
    h = x
    for w, b in params:
        h = jnp.dot(h, w) + b
        h = jnp.where(h >= 0, h, 0.1 * h)
    return h


if __name__ == "__main__":
    key = jax.random.PRNGKey(0)
    n_input = 32
    batch = 8
    key, kx = jax.random.split(key)
    x = jax.random.normal(kx, (batch, n_input), jnp.float32)

    params = init_params(jax.random.PRNGKey(42), n_input)

    out = large_block_forward(x, params)
    out = jax.block_until_ready(out)

    ref = reference_forward(x, params)
    assert out.shape == (batch, 1)
    assert jnp.allclose(out, ref, atol=1e-5, rtol=1e-5), "mismatch vs reference"
    print("KERNEL_OK")
</pallas_src>

<mosaic_0001>
module attributes {stable_mosaic.version = 11 : i64} {
  func.func @large_block_kernel(%arg0: i32, %arg1: memref<32x256xf32, #tpu.memory_space<vmem>>, %arg2: memref<100x32xf32, #tpu.memory_space<vmem>>, %arg3: memref<100x1xf32, #tpu.memory_space<vmem>>, %arg4: memref<50x100xf32, #tpu.memory_space<vmem>>, %arg5: memref<50x1xf32, #tpu.memory_space<vmem>>, %arg6: memref<25x50xf32, #tpu.memory_space<vmem>>, %arg7: memref<25x1xf32, #tpu.memory_space<vmem>>, %arg8: memref<10x25xf32, #tpu.memory_space<vmem>>, %arg9: memref<10x1xf32, #tpu.memory_space<vmem>>, %arg10: memref<10x1xf32, #tpu.memory_space<vmem>>, %arg11: memref<1x1xf32, #tpu.memory_space<vmem>>, %arg12: memref<1x1x256xf32, #tpu.memory_space<vmem>>) attributes {dimension_semantics = [#tpu.dimension_semantics<parallel>], iteration_bounds = array<i64: 1>, scalar_prefetch = 0 : i64, scratch_operands = 0 : i64, tpu.core_type = #tpu.core_type<tc>, window_params = [{transform_indices = @transform_0, window_bounds = array<i64: 32, 256>}, {pipeline_mode = #tpu.pipeline_mode<synchronous>, transform_indices = @transform_1, window_bounds = array<i64: 100, 32>}, {pipeline_mode = #tpu.pipeline_mode<synchronous>, transform_indices = @transform_2, window_bounds = array<i64: 100, 1>}, {pipeline_mode = #tpu.pipeline_mode<synchronous>, transform_indices = @transform_3, window_bounds = array<i64: 50, 100>}, {pipeline_mode = #tpu.pipeline_mode<synchronous>, transform_indices = @transform_4, window_bounds = array<i64: 50, 1>}, {pipeline_mode = #tpu.pipeline_mode<synchronous>, transform_indices = @transform_5, window_bounds = array<i64: 25, 50>}, {pipeline_mode = #tpu.pipeline_mode<synchronous>, transform_indices = @transform_6, window_bounds = array<i64: 25, 1>}, {pipeline_mode = #tpu.pipeline_mode<synchronous>, transform_indices = @transform_7, window_bounds = array<i64: 10, 25>}, {pipeline_mode = #tpu.pipeline_mode<synchronous>, transform_indices = @transform_8, window_bounds = array<i64: 10, 1>}, {pipeline_mode = #tpu.pipeline_mode<synchronous>, transform_indices = @transform_9, window_bounds = array<i64: 10, 1>}, {pipeline_mode = #tpu.pipeline_mode<synchronous>, transform_indices = @transform_10, window_bounds = array<i64: 1, 1>}, {transform_indices = @transform_11, window_bounds = array<i64: 1, 1, 256>}]} {
    %c0 = arith.constant 0 : index
    %c0_0 = arith.constant 0 : index
    %0 = vector.load %arg1[%c0, %c0_0] : memref<32x256xf32, #tpu.memory_space<vmem>>, vector<32x256xf32>
    %c0_1 = arith.constant 0 : index
    %c0_2 = arith.constant 0 : index
    %1 = vector.load %arg2[%c0_1, %c0_2] : memref<100x32xf32, #tpu.memory_space<vmem>>, vector<100x32xf32>
    %cst = arith.constant dense<0.000000e+00> : vector<100x256xf32>
    %2 = tpu.matmul %1, %0, %cst {dimension_numbers = #tpu.dot_dimension_numbers<[1], [0], [0], [1], [0, 0, 1, 1], [], []>} : vector<100x32xf32>, vector<32x256xf32>, vector<100x256xf32> -> vector<100x256xf32>
    %c0_3 = arith.constant 0 : index
    %c0_4 = arith.constant 0 : index
    %3 = vector.load %arg3[%c0_3, %c0_4] : memref<100x1xf32, #tpu.memory_space<vmem>>, vector<100x1xf32>
    %4 = vector.broadcast %3 : vector<100x1xf32> to vector<100x256xf32>
    %5 = arith.addf %2, %4 : vector<100x256xf32>
    %cst_5 = arith.constant 0.000000e+00 : f32
    %6 = vector.broadcast %cst_5 : f32 to vector<100x256xf32>
    %7 = arith.cmpf oge, %5, %6 : vector<100x256xf32>
    %cst_6 = arith.constant 1.000000e-01 : f32
    %8 = vector.broadcast %cst_6 : f32 to vector<100x256xf32>
    %9 = arith.mulf %8, %5 : vector<100x256xf32>
    %10 = arith.select %7, %5, %9 : vector<100x256xi1>, vector<100x256xf32>
    %c0_7 = arith.constant 0 : index
    %c0_8 = arith.constant 0 : index
    %11 = vector.load %arg4[%c0_7, %c0_8] : memref<50x100xf32, #tpu.memory_space<vmem>>, vector<50x100xf32>
    %cst_9 = arith.constant dense<0.000000e+00> : vector<50x256xf32>
    %12 = tpu.matmul %11, %10, %cst_9 {dimension_numbers = #tpu.dot_dimension_numbers<[1], [0], [0], [1], [0, 0, 1, 1], [], []>} : vector<50x100xf32>, vector<100x256xf32>, vector<50x256xf32> -> vector<50x256xf32>
    %c0_10 = arith.constant 0 : index
    %c0_11 = arith.constant 0 : index
    %13 = vector.load %arg5[%c0_10, %c0_11] : memref<50x1xf32, #tpu.memory_space<vmem>>, vector<50x1xf32>
    %14 = vector.broadcast %13 : vector<50x1xf32> to vector<50x256xf32>
    %15 = arith.addf %12, %14 : vector<50x256xf32>
    %cst_12 = arith.constant 0.000000e+00 : f32
    %16 = vector.broadcast %cst_12 : f32 to vector<50x256xf32>
    %17 = arith.cmpf oge, %15, %16 : vector<50x256xf32>
    %cst_13 = arith.constant 1.000000e-01 : f32
    %18 = vector.broadcast %cst_13 : f32 to vector<50x256xf32>
    %19 = arith.mulf %18, %15 : vector<50x256xf32>
    %20 = arith.select %17, %15, %19 : vector<50x256xi1>, vector<50x256xf32>
    %c0_14 = arith.constant 0 : index
    %c0_15 = arith.constant 0 : index
    %21 = vector.load %arg6[%c0_14, %c0_15] : memref<25x50xf32, #tpu.memory_space<vmem>>, vector<25x50xf32>
    %cst_16 = arith.constant dense<0.000000e+00> : vector<25x256xf32>
    %22 = tpu.matmul %21, %20, %cst_16 {dimension_numbers = #tpu.dot_dimension_numbers<[1], [0], [0], [1], [0, 0, 1, 1], [], []>} : vector<25x50xf32>, vector<50x256xf32>, vector<25x256xf32> -> vector<25x256xf32>
    %c0_17 = arith.constant 0 : index
    %c0_18 = arith.constant 0 : index
    %23 = vector.load %arg7[%c0_17, %c0_18] : memref<25x1xf32, #tpu.memory_space<vmem>>, vector<25x1xf32>
    %24 = vector.broadcast %23 : vector<25x1xf32> to vector<25x256xf32>
    %25 = arith.addf %22, %24 : vector<25x256xf32>
    %cst_19 = arith.constant 0.000000e+00 : f32
    %26 = vector.broadcast %cst_19 : f32 to vector<25x256xf32>
    %27 = arith.cmpf oge, %25, %26 : vector<25x256xf32>
    %cst_20 = arith.constant 1.000000e-01 : f32
    %28 = vector.broadcast %cst_20 : f32 to vector<25x256xf32>
    %29 = arith.mulf %28, %25 : vector<25x256xf32>
    %30 = arith.select %27, %25, %29 : vector<25x256xi1>, vector<25x256xf32>
    %c0_21 = arith.constant 0 : index
    %c0_22 = arith.constant 0 : index
    %31 = vector.load %arg8[%c0_21, %c0_22] : memref<10x25xf32, #tpu.memory_space<vmem>>, vector<10x25xf32>
    %cst_23 = arith.constant dense<0.000000e+00> : vector<10x256xf32>
    %32 = tpu.matmul %31, %30, %cst_23 {dimension_numbers = #tpu.dot_dimension_numbers<[1], [0], [0], [1], [0, 0, 1, 1], [], []>} : vector<10x25xf32>, vector<25x256xf32>, vector<10x256xf32> -> vector<10x256xf32>
    %c0_24 = arith.constant 0 : index
    %c0_25 = arith.constant 0 : index
    %33 = vector.load %arg9[%c0_24, %c0_25] : memref<10x1xf32, #tpu.memory_space<vmem>>, vector<10x1xf32>
    %34 = vector.broadcast %33 : vector<10x1xf32> to vector<10x256xf32>
    %35 = arith.addf %32, %34 : vector<10x256xf32>
    %cst_26 = arith.constant 0.000000e+00 : f32
    %36 = vector.broadcast %cst_26 : f32 to vector<10x256xf32>
    %37 = arith.cmpf oge, %35, %36 : vector<10x256xf32>
    %cst_27 = arith.constant 1.000000e-01 : f32
    %38 = vector.broadcast %cst_27 : f32 to vector<10x256xf32>
    %39 = arith.mulf %38, %35 : vector<10x256xf32>
    %40 = arith.select %37, %35, %39 : vector<10x256xi1>, vector<10x256xf32>
    %c0_28 = arith.constant 0 : index
    %c0_29 = arith.constant 0 : index
    %41 = vector.load %arg10[%c0_28, %c0_29] : memref<10x1xf32, #tpu.memory_space<vmem>>, vector<10x1xf32>
    %42 = vector.broadcast %41 : vector<10x1xf32> to vector<10x256xf32>
    %43 = arith.mulf %40, %42 : vector<10x256xf32>
    %cst_30 = arith.constant dense<0.000000e+00> : vector<256xf32>
    %44 = vector.multi_reduction <add>, %43, %cst_30 [0] : vector<10x256xf32> to vector<256xf32>
    %45 = vector.shape_cast %44 : vector<256xf32> to vector<1x256xf32>
    %c0_31 = arith.constant 0 : index
    %c0_32 = arith.constant 0 : index
    %46 = vector.load %arg11[%c0_31, %c0_32] : memref<1x1xf32, #tpu.memory_space<vmem>>, vector<1x1xf32>
    %47 = vector.broadcast %46 : vector<1x1xf32> to vector<1x256xf32>
    %48 = arith.addf %45, %47 : vector<1x256xf32>
    %cst_33 = arith.constant 0.000000e+00 : f32
    %49 = vector.broadcast %cst_33 : f32 to vector<1x256xf32>
    %50 = arith.cmpf oge, %48, %49 : vector<1x256xf32>
    %cst_34 = arith.constant 1.000000e-01 : f32
    %51 = vector.broadcast %cst_34 : f32 to vector<1x256xf32>
    %52 = arith.mulf %51, %48 : vector<1x256xf32>
    %53 = arith.select %50, %48, %52 : vector<1x256xi1>, vector<1x256xf32>
    %c0_35 = arith.constant 0 : index
    %c0_36 = arith.constant 0 : index
    %c0_37 = arith.constant 0 : index
    %54 = vector.load %arg12[%c0_35, %c0_36, %c0_37] : memref<1x1x256xf32, #tpu.memory_space<vmem>>, vector<1x1x256xf32>
    %55 = vector.shape_cast %54 : vector<1x1x256xf32> to vector<1x256xf32>
    %56 = vector.shape_cast %53 : vector<1x256xf32> to vector<1x1x256xf32>
    tpu.vector_store %arg12[%c0_35, %c0_36, %c0_37], %56 {strides = array<i32>} : memref<1x1x256xf32, #tpu.memory_space<vmem>>, vector<1x1x256xf32>,
    return
  }
  func.func @transform_0(%arg0: i32) -> (i32, i32) {
    %c0_i32 = arith.constant 0 : i32
    %c0_i32_0 = arith.constant 0 : i32
    return %c0_i32, %arg0 : i32, i32
  }
  func.func @transform_1(%arg0: i32) -> (i32, i32) {
    %c0_i32 = arith.constant 0 : i32
    %c0_i32_0 = arith.constant 0 : i32
    %c0_i32_1 = arith.constant 0 : i32
    return %c0_i32, %c0_i32_0 : i32, i32
  }
  func.func @transform_2(%arg0: i32) -> (i32, i32) {
    %c0_i32 = arith.constant 0 : i32
    %c0_i32_0 = arith.constant 0 : i32
    %c0_i32_1 = arith.constant 0 : i32
    return %c0_i32, %c0_i32_0 : i32, i32
  }
  func.func @transform_3(%arg0: i32) -> (i32, i32) {
    %c0_i32 = arith.constant 0 : i32
    %c0_i32_0 = arith.constant 0 : i32
    %c0_i32_1 = arith.constant 0 : i32
    return %c0_i32, %c0_i32_0 : i32, i32
  }
  func.func @transform_4(%arg0: i32) -> (i32, i32) {
    %c0_i32 = arith.constant 0 : i32
    %c0_i32_0 = arith.constant 0 : i32
    %c0_i32_1 = arith.constant 0 : i32
    return %c0_i32, %c0_i32_0 : i32, i32
  }
  func.func @transform_5(%arg0: i32) -> (i32, i32) {
    %c0_i32 = arith.constant 0 : i32
    %c0_i32_0 = arith.constant 0 : i32
    %c0_i32_1 = arith.constant 0 : i32
    return %c0_i32, %c0_i32_0 : i32, i32
  }
  func.func @transform_6(%arg0: i32) -> (i32, i32) {
    %c0_i32 = arith.constant 0 : i32
    %c0_i32_0 = arith.constant 0 : i32
    %c0_i32_1 = arith.constant 0 : i32
    return %c0_i32, %c0_i32_0 : i32, i32
  }
  func.func @transform_7(%arg0: i32) -> (i32, i32) {
    %c0_i32 = arith.constant 0 : i32
    %c0_i32_0 = arith.constant 0 : i32
    %c0_i32_1 = arith.constant 0 : i32
    return %c0_i32, %c0_i32_0 : i32, i32
  }
  func.func @transform_8(%arg0: i32) -> (i32, i32) {
    %c0_i32 = arith.constant 0 : i32
    %c0_i32_0 = arith.constant 0 : i32
    %c0_i32_1 = arith.constant 0 : i32
    return %c0_i32, %c0_i32_0 : i32, i32
  }
  func.func @transform_9(%arg0: i32) -> (i32, i32) {
    %c0_i32 = arith.constant 0 : i32
    %c0_i32_0 = arith.constant 0 : i32
    %c0_i32_1 = arith.constant 0 : i32
    return %c0_i32, %c0_i32_0 : i32, i32
  }
  func.func @transform_10(%arg0: i32) -> (i32, i32) {
    %c0_i32 = arith.constant 0 : i32
    %c0_i32_0 = arith.constant 0 : i32
    %c0_i32_1 = arith.constant 0 : i32
    return %c0_i32, %c0_i32_0 : i32, i32
  }
  func.func @transform_11(%arg0: i32) -> (i32, i32, i32) {
    %c0_i32 = arith.constant 0 : i32
    %c0_i32_0 = arith.constant 0 : i32
    %c0_i32_1 = arith.constant 0 : i32
    return %arg0, %c0_i32, %c0_i32_0 : i32, i32, i32
  }
}

</mosaic_0001>

<llo_original>
// kernel: large_block_forward.1
$region0: #{large_block_forward.1}
  #allocation0 [shape = 'u32[]', space=smem, size = 0x4, offset = 0x4, fixed_abs, tag = 'smem constant byte address 0x4 - core index']
  #allocation1 [shape = 'u32[72,128]{1,0:T(1,128)}', space=vmem, size = 0x9000, scoped, tag = 'internal scratch']
  #allocation2 [shape = 'f32[1,1]{1,0:T(1,128)S(1)}', space=vmem, size = 0x200, scoped, tag = 'scoped memory for large_block_forward.1']
  %s0 = inlined_call_operand.vmem [shape: f32[32,256], index: 0, kind: input, shape index: {}]
  %s1 = inlined_call_operand.vmem [shape: f32[100,32], index: 1, kind: input, shape index: {}]
  %s2 = inlined_call_operand.vmem [shape: f32[100,1], index: 2, kind: input, shape index: {}]
  %s3 = inlined_call_operand.vmem [shape: f32[50,100], index: 3, kind: input, shape index: {}]
  %s4 = inlined_call_operand.vmem [shape: f32[50,1], index: 4, kind: input, shape index: {}]
  %s5 = inlined_call_operand.vmem [shape: f32[25,50], index: 5, kind: input, shape index: {}]
  %s6 = inlined_call_operand.vmem [shape: f32[25,1], index: 6, kind: input, shape index: {}]
  %s7 = inlined_call_operand.vmem [shape: f32[10,25], index: 7, kind: input, shape index: {}]
  %s8 = inlined_call_operand.vmem [shape: f32[10,1], index: 8, kind: input, shape index: {}]
  %s9 = inlined_call_operand.vmem [shape: f32[10,1], index: 9, kind: input, shape index: {}]
  %s10 = inlined_call_operand.<no memory space> [shape: f32[1,1], index: 10, kind: input, shape index: {}]
  %s11 = inlined_call_operand.vmem [shape: f32[1,1,256], index: 11, kind: output, shape index: {}]
  %s12 = sld [smem:[#allocation0]]
  $region54: #{large_block_forward.1} parent=0
    _
  %s14 = ssub.s32 1, %s12
  %s15 = scalar_select 0, %s14, %s12
  %v16 = vstv %s10
  %17 = vst [vmem:[#allocation2] sm:$0x1] %v16
  // Predicated region
  $region2: #{large_block_forward.1} parent=0 // pred_check
    _
  $region3: #{large_block_forward.1} parent=0 // pred_check_branch
    %19 = sbr.rel (0) target = $region5
  $region4: #{large_block_forward.1} parent=0 // pred_region
    _
  $region5: #{large_block_forward.1} parent=0 // pred_fallthru
    _
  // Predicated region
  $region6: #{large_block_forward.1} parent=0 // pred_check
    _
  $region7: #{large_block_forward.1} parent=0 // pred_check_branch
    %21 = sbr.rel (0) target = $region9
  $region8: #{large_block_forward.1} parent=0 // pred_region
    _
  $region9: #{large_block_forward.1} parent=0 // pred_fallthru
    _
  // Predicated region
  $region10: #{large_block_forward.1} parent=0 // pred_check
    _
  $region11: #{large_block_forward.1} parent=0 // pred_check_branch
    %23 = sbr.rel (0) target = $region13
  $region12: #{large_block_forward.1} parent=0 // pred_region
    _
  $region13: #{large_block_forward.1} parent=0 // pred_fallthru
    _
  // Predicated region
  $region14: #{large_block_forward.1} parent=0 // pred_check
    _
  $region15: #{large_block_forward.1} parent=0 // pred_check_branch
    %25 = sbr.rel (0) target = $region17
  $region16: #{large_block_forward.1} parent=0 // pred_region
    _
  $region17: #{large_block_forward.1} parent=0 // pred_fallthru
    _
  // Predicated region
  $region18: #{large_block_forward.1} parent=0 // pred_check
    _
  $region19: #{large_block_forward.1} parent=0 // pred_check_branch
    %27 = sbr.rel (0) target = $region21
  $region20: #{large_block_forward.1} parent=0 // pred_region
    _
  $region21: #{large_block_forward.1} parent=0 // pred_fallthru
    _
  // Predicated region
  $region22: #{large_block_forward.1} parent=0 // pred_check
    _
  $region23: #{large_block_forward.1} parent=0 // pred_check_branch
    %29 = sbr.rel (0) target = $region25
  $region24: #{large_block_forward.1} parent=0 // pred_region
    _
  $region25: #{large_block_forward.1} parent=0 // pred_fallthru
    _
  // Predicated region
  $region26: #{large_block_forward.1} parent=0 // pred_check
    _
  $region27: #{large_block_forward.1} parent=0 // pred_check_branch
    %31 = sbr.rel (0) target = $region29
  $region28: #{large_block_forward.1} parent=0 // pred_region
    _
  $region29: #{large_block_forward.1} parent=0 // pred_fallthru
    _
  // Predicated region
  $region30: #{large_block_forward.1} parent=0 // pred_check
    _
  $region31: #{large_block_forward.1} parent=0 // pred_check_branch
    %33 = sbr.rel (0) target = $region33
  $region32: #{large_block_forward.1} parent=0 // pred_region
    _
  $region33: #{large_block_forward.1} parent=0 // pred_fallthru
    _
  // Predicated region
  $region34: #{large_block_forward.1} parent=0 // pred_check
    _
  $region35: #{large_block_forward.1} parent=0 // pred_check_branch
    %35 = sbr.rel (0) target = $region37
  $region36: #{large_block_forward.1} parent=0 // pred_region
    _
  $region37: #{large_block_forward.1} parent=0 // pred_fallthru
    _
  // Predicated region
  $region38: #{large_block_forward.1} parent=0 // pred_check
    _
  $region39: #{large_block_forward.1} parent=0 // pred_check_branch
    %37 = sbr.rel (0) target = $region41
  $region40: #{large_block_forward.1} parent=0 // pred_region
    _
  $region41: #{large_block_forward.1} parent=0 // pred_fallthru
    _
  // Predicated region
  $region42: #{large_block_forward.1} parent=0 // pred_check
    _
  $region43: #{large_block_forward.1} parent=0 // pred_check_branch
    %39 = sbr.rel (0) target = $region45
  $region44: #{large_block_forward.1} parent=0 // pred_region
    _
  $region45: #{large_block_forward.1} parent=0 // pred_fallthru
    _
  %v40 = vld [vmem:[%s0] sm:$0xff]
  %v41 = vld [vmem:[%s0 + $0x8] sm:$0xff]
  %v42 = vld [vmem:[%s0 + $0x10] sm:$0xff]
  %v43 = vld [vmem:[%s0 + $0x18] sm:$0xff]
  %v44 = vld [vmem:[%s0 + $0x20] sm:$0xff]
  %v45 = vld [vmem:[%s0 + $0x28] sm:$0xff]
  %v46 = vld [vmem:[%s0 + $0x30] sm:$0xff]
  %v47 = vld [vmem:[%s0 + $0x38] sm:$0xff]
  %v48 = vld [vmem:[%s1] sm:$0xff]
  %v49 = vld [vmem:[%s1 + $0x8] sm:$0xff]
  %v50 = vld [vmem:[%s1 + $0x10] sm:$0xff]
  %v51 = vld [vmem:[%s1 + $0x18] sm:$0xff]
  %v52 = vld [vmem:[%s1 + $0x20] sm:$0xff]
  %v53 = vld [vmem:[%s1 + $0x28] sm:$0xff]
  %v54 = vld [vmem:[%s1 + $0x30] sm:$0xff]
  %v55 = vld [vmem:[%s1 + $0x38] sm:$0xff]
  %v56 = vld [vmem:[%s1 + $0x40] sm:$0xff]
  %v57 = vld [vmem:[%s1 + $0x48] sm:$0xff]
  %v58 = vld [vmem:[%s1 + $0x50] sm:$0xff]
  %v59 = vld [vmem:[%s1 + $0x58] sm:$0xff]
  %v60 = vld [vmem:[%s1 + $0x60] sm:$0xf]
  %v61 = vld [vmem:[%s2] sm:$0xff]
  %v62 = vld [vmem:[%s2 + $0x8] sm:$0xff]
  %v63 = vld [vmem:[%s2 + $0x10] sm:$0xff]
  %v64 = vld [vmem:[%s2 + $0x18] sm:$0xff]
  %v65 = vld [vmem:[%s2 + $0x20] sm:$0xff]
  %v66 = vld [vmem:[%s2 + $0x28] sm:$0xff]
  %v67 = vld [vmem:[%s2 + $0x30] sm:$0xff]
  %v68 = vld [vmem:[%s2 + $0x38] sm:$0xff]
  %v69 = vld [vmem:[%s2 + $0x40] sm:$0xff]
  %v70 = vld [vmem:[%s2 + $0x48] sm:$0xff]
  %v71 = vld [vmem:[%s2 + $0x50] sm:$0xff]
  %v72 = vld [vmem:[%s2 + $0x58] sm:$0xff]
  %v73 = vld [vmem:[%s2 + $0x60] sm:$0xf]
  %75 = vset.pattern.permute.xlu0 0
  %76 = vperm.xlu0 %75, %v61
  %v77 = vpop.permute.xlu0 %76
  %80 = vset.pattern.permute.xlu0 0
  %81 = vperm.xlu0 %80, %v62
  %v82 = vpop.permute.xlu0 %81
  %85 = vset.pattern.permute.xlu0 0
  %86 = vperm.xlu0 %85, %v63
  %v87 = vpop.permute.xlu0 %86
  %90 = vset.pattern.permute.xlu0 0
  %91 = vperm.xlu0 %90, %v64
  %v92 = vpop.permute.xlu0 %91
  %95 = vset.pattern.permute.xlu0 0
  %96 = vperm.xlu0 %95, %v65
  %v97 = vpop.permute.xlu0 %96
  %100 = vset.pattern.permute.xlu0 0
  %101 = vperm.xlu0 %100, %v66
  %v102 = vpop.permute.xlu0 %101
  %105 = vset.pattern.permute.xlu0 0
  %106 = vperm.xlu0 %105, %v67
  %v107 = vpop.permute.xlu0 %106
  %110 = vset.pattern.permute.xlu0 0
  %111 = vperm.xlu0 %110, %v68
  %v112 = vpop.permute.xlu0 %111
  %115 = vset.pattern.permute.xlu0 0
  %116 = vperm.xlu0 %115, %v69
  %v117 = vpop.permute.xlu0 %116
  %120 = vset.pattern.permute.xlu0 0
  %121 = vperm.xlu0 %120, %v70
  %v122 = vpop.permute.xlu0 %121
  %125 = vset.pattern.permute.xlu0 0
  %126 = vperm.xlu0 %125, %v71
  %v127 = vpop.permute.xlu0 %126
  %130 = vset.pattern.permute.xlu0 0
  %131 = vperm.xlu0 %130, %v72
  %v132 = vpop.permute.xlu0 %131
  %135 = vset.pattern.permute.xlu0 0
  %136 = vperm.xlu0 %135, %v73
  %v137 = vpop.permute.xlu0 %136
  %vm139 = vcmask 261120
  %v141 = vsel %vm139, %v48, 0
  %v144 = vsel %vm139, %v49, 0
  %v147 = vsel %vm139, %v50, 0
  %v150 = vsel %vm139, %v51, 0
  %v153 = vsel %vm139, %v52, 0
  %v156 = vsel %vm139, %v53, 0
  %v159 = vsel %vm139, %v54, 0
  %v162 = vsel %vm139, %v55, 0
  %v165 = vsel %vm139, %v56, 0
  %v168 = vsel %vm139, %v57, 0
  %v171 = vsel %vm139, %v58, 0
  %v174 = vsel %vm139, %v59, 0
  %v177 = vsel %vm139, %v60, 0
  %179 = vmatpush.msra.mxu0 0.0
  %180 = vmatpush.msra.mxu0 0.0
  %181 = vmatpush.msra.mxu0 0.0
  %182 = vmatpush.msra.mxu0 0.0
  %183 = vmatpush.msra.mxu0 0.0
  %184 = vmatpush.msra.mxu0 0.0
  %185 = vmatpush.msra.mxu0 0.0
  %186 = vmatpush.msra.mxu0 0.0
  %187 = vmatpush.msra.mxu0 0.0
  %188 = vmatpush.msra.mxu0 0.0
  %189 = vmatpush.msra.mxu0 0.0
  %190 = vmatpush.msra.mxu0 0.0
  %191 = vmatpush.msra.mxu0 %v46
  %192 = vmatpush.msra.mxu0 %v44
  %193 = vmatpush.msra.mxu0 %v42
  %194 = vmatpush.msra.mxu0 %v40
  %195 = vmatmul.f32.gmra.mxu0 %v141
  %v196 = vpop.f32.mrf.mxu0
  %v197 = vadd.f32 %v77, %v196
  %198 = vmatmul.f32.gmra.mxu0 %v144
  %v199 = vpop.f32.mrf.mxu0
  %v200 = vadd.f32 %v82, %v199
  %201 = vmatmul.f32.gmra.mxu0 %v147
  %v202 = vpop.f32.mrf.mxu0
  %v203 = vadd.f32 %v87, %v202
  %204 = vmatmul.f32.gmra.mxu0 %v150
  %v205 = vpop.f32.mrf.mxu0
  %v206 = vadd.f32 %v92, %v205
  %207 = vmatmul.f32.gmra.mxu0 %v153
  %v208 = vpop.f32.mrf.mxu0
  %v209 = vadd.f32 %v97, %v208
  %210 = vmatmul.f32.gmra.mxu0 %v156
  %v211 = vpop.f32.mrf.mxu0
  %v212 = vadd.f32 %v102, %v211
  %213 = vmatmul.f32.gmra.mxu0 %v159
  %v214 = vpop.f32.mrf.mxu0
  %v215 = vadd.f32 %v107, %v214
  %216 = vmatmul.f32.gmra.mxu0 %v162
  %v217 = vpop.f32.mrf.mxu0
  %v218 = vadd.f32 %v112, %v217
  %219 = vmatmul.f32.gmra.mxu0 %v165
  %v220 = vpop.f32.mrf.mxu0
  %v221 = vadd.f32 %v117, %v220
  %222 = vmatmul.f32.gmra.mxu0 %v168
  %v223 = vpop.f32.mrf.mxu0
  %v224 = vadd.f32 %v122, %v223
  %225 = vmatmul.f32.gmra.mxu0 %v171
  %v226 = vpop.f32.mrf.mxu0
  %v227 = vadd.f32 %v127, %v226
  %228 = vmatmul.f32.gmra.mxu0 %v174
  %v229 = vpop.f32.mrf.mxu0
  %v230 = vadd.f32 %v132, %v229
  %231 = vmatmul.f32.gmra.mxu0 %v177
  %v232 = vpop.f32.mrf.mxu0
  %v233 = vadd.f32 %v137, %v232
  %234 = vdwg.mxu0
  %235 = vmatpush.msra.mxu0 0.0
  %236 = vmatpush.msra.mxu0 0.0
  %237 = vmatpush.msra.mxu0 0.0
  %238 = vmatpush.msra.mxu0 0.0
  %239 = vmatpush.msra.mxu0 0.0
  %240 = vmatpush.msra.mxu0 0.0
  %241 = vmatpush.msra.mxu0 0.0
  %242 = vmatpush.msra.mxu0 0.0
  %243 = vmatpush.msra.mxu0 0.0
  %244 = vmatpush.msra.mxu0 0.0
  %245 = vmatpush.msra.mxu0 0.0
  %246 = vmatpush.msra.mxu0 0.0
  %247 = vmatpush.msra.mxu0 %v47
  %248 = vmatpush.msra.mxu0 %v45
  %249 = vmatpush.msra.mxu0 %v43
  %250 = vmatpush.msra.mxu0 %v41
  %251 = vmatmul.f32.gmra.mxu0 %v141
  %v252 = vpop.f32.mrf.mxu0
  %v253 = vadd.f32 %v77, %v252
  %254 = vmatmul.f32.gmra.mxu0 %v144
  %v255 = vpop.f32.mrf.mxu0
  %v256 = vadd.f32 %v82, %v255
  %257 = vmatmul.f32.gmra.mxu0 %v147
  %v258 = vpop.f32.mrf.mxu0
  %v259 = vadd.f32 %v87, %v258
  %260 = vmatmul.f32.gmra.mxu0 %v150
  %v261 = vpop.f32.mrf.mxu0
  %v262 = vadd.f32 %v92, %v261
  %263 = vmatmul.f32.gmra.mxu0 %v153
  %v264 = vpop.f32.mrf.mxu0
  %v265 = vadd.f32 %v97, %v264
  %266 = vmatmul.f32.gmra.mxu0 %v156
  %v267 = vpop.f32.mrf.mxu0
  %v268 = vadd.f32 %v102, %v267
  %269 = vmatmul.f32.gmra.mxu0 %v159
  %v270 = vpop.f32.mrf.mxu0
  %v271 = vadd.f32 %v107, %v270
  %272 = vmatmul.f32.gmra.mxu0 %v162
  %v273 = vpop.f32.mrf.mxu0
  %v274 = vadd.f32 %v112, %v273
  %275 = vmatmul.f32.gmra.mxu0 %v165
  %v276 = vpop.f32.mrf.mxu0
  %v277 = vadd.f32 %v117, %v276
  %278 = vmatmul.f32.gmra.mxu0 %v168
  %v279 = vpop.f32.mrf.mxu0
  %v280 = vadd.f32 %v122, %v279
  %281 = vmatmul.f32.gmra.mxu0 %v171
  %v282 = vpop.f32.mrf.mxu0
  %v283 = vadd.f32 %v127, %v282
  %284 = vmatmul.f32.gmra.mxu0 %v174
  %v285 = vpop.f32.mrf.mxu0
  %v286 = vadd.f32 %v132, %v285
  %287 = vmatmul.f32.gmra.mxu0 %v177
  %v288 = vpop.f32.mrf.mxu0
  %v289 = vadd.f32 %v137, %v288
  %290 = vdwg.mxu0
  %vm291 = vcmp.ge.f32.partialorder %v197, 0.0
  %vm292 = vcmp.ge.f32.partialorder %v253, 0.0
  %vm293 = vcmp.ge.f32.partialorder %v200, 0.0
  %vm294 = vcmp.ge.f32.partialorder %v256, 0.0
  %vm295 = vcmp.ge.f32.partialorder %v203, 0.0
  %vm296 = vcmp.ge.f32.partialorder %v259, 0.0
  %vm297 = vcmp.ge.f32.partialorder %v206, 0.0
  %vm298 = vcmp.ge.f32.partialorder %v262, 0.0
  %vm299 = vcmp.ge.f32.partialorder %v209, 0.0
  %vm300 = vcmp.ge.f32.partialorder %v265, 0.0
  %vm301 = vcmp.ge.f32.partialorder %v212, 0.0
  %vm302 = vcmp.ge.f32.partialorder %v268, 0.0
  %vm303 = vcmp.ge.f32.partialorder %v215, 0.0
  %vm304 = vcmp.ge.f32.partialorder %v271, 0.0
  %vm305 = vcmp.ge.f32.partialorder %v218, 0.0
  %vm306 = vcmp.ge.f32.partialorder %v274, 0.0
  %vm307 = vcmp.ge.f32.partialorder %v221, 0.0
  %vm308 = vcmp.ge.f32.partialorder %v277, 0.0
  %vm309 = vcmp.ge.f32.partialorder %v224, 0.0
  %vm310 = vcmp.ge.f32.partialorder %v280, 0.0
  %vm311 = vcmp.ge.f32.partialorder %v227, 0.0
  %vm312 = vcmp.ge.f32.partialorder %v283, 0.0
  %vm313 = vcmp.ge.f32.partialorder %v230, 0.0
  %vm314 = vcmp.ge.f32.partialorder %v286, 0.0
  %vm315 = vcmp.ge.f32.partialorder %v233, 0.0
  %vm316 = vcmp.ge.f32.partialorder %v289, 0.0
  %v317 = vmul.f32 %v197, 0.1
  %v318 = vmul.f32 %v253, 0.1
  %v319 = vmul.f32 %v200, 0.1
  %v320 = vmul.f32 %v256, 0.1
  %v321 = vmul.f32 %v203, 0.1
  %v322 = vmul.f32 %v259, 0.1
  %v323 = vmul.f32 %v206, 0.1
  %v324 = vmul.f32 %v262, 0.1
  %v325 = vmul.f32 %v209, 0.1
  %v326 = vmul.f32 %v265, 0.1
  %v327 = vmul.f32 %v212, 0.1
  %v328 = vmul.f32 %v268, 0.1
  %v329 = vmul.f32 %v215, 0.1
  %v330 = vmul.f32 %v271, 0.1
  %v331 = vmul.f32 %v218, 0.1
  %v332 = vmul.f32 %v274, 0.1
  %v333 = vmul.f32 %v221, 0.1
  %v334 = vmul.f32 %v277, 0.1
  %v335 = vmul.f32 %v224, 0.1
  %v336 = vmul.f32 %v280, 0.1
  %v337 = vmul.f32 %v227, 0.1
  %v338 = vmul.f32 %v283, 0.1
  %v339 = vmul.f32 %v230, 0.1
  %v340 = vmul.f32 %v286, 0.1
  %v341 = vmul.f32 %v233, 0.1
  %v342 = vmul.f32 %v289, 0.1
  %v343 = vsel %vm291, %v197, %v317
  %v344 = vsel %vm292, %v253, %v318
  %v345 = vsel %vm293, %v200, %v319
  %v346 = vsel %vm294, %v256, %v320
  %v347 = vsel %vm295, %v203, %v321
  %v348 = vsel %vm296, %v259, %v322
  %v349 = vsel %vm297, %v206, %v323
  %v350 = vsel %vm298, %v262, %v324
  %v351 = vsel %vm299, %v209, %v325
  %v352 = vsel %vm300, %v265, %v326
  %v353 = vsel %vm301, %v212, %v327
  %v354 = vsel %vm302, %v268, %v328
  %v355 = vsel %vm303, %v215, %v329
  %v356 = vsel %vm304, %v271, %v330
  %v357 = vsel %vm305, %v218, %v331
  %v358 = vsel %vm306, %v274, %v332
  %v359 = vsel %vm307, %v221, %v333
  %v360 = vsel %vm308, %v277, %v334
  %v361 = vsel %vm309, %v224, %v335
  %v362 = vsel %vm310, %v280, %v336
  %v363 = vsel %vm311, %v227, %v337
  %v364 = vsel %vm312, %v283, %v338
  %v365 = vsel %vm313, %v230, %v339
  %v366 = vsel %vm314, %v286, %v340
  %v367 = vsel %vm315, %v233, %v341
  %v368 = vsel %vm316, %v289, %v342
  %v369 = vld [vmem:[%s3] sm:$0xff]
  %v370 = vld [vmem:[%s3 + $0x8] sm:$0xff]
  %v371 = vld [vmem:[%s3 + $0x10] sm:$0xff]
  %v372 = vld [vmem:[%s3 + $0x18] sm:$0xff]
  %v373 = vld [vmem:[%s3 + $0x20] sm:$0xff]
  %v374 = vld [vmem:[%s3 + $0x28] sm:$0xff]
  %v375 = vld [vmem:[%s3 + $0x30] sm:$0x3]
  %v376 = vld [vmem:[%s4] sm:$0xff]
  %v377 = vld [vmem:[%s4 + $0x8] sm:$0xff]
  %v378 = vld [vmem:[%s4 + $0x10] sm:$0xff]
  %v379 = vld [vmem:[%s4 + $0x18] sm:$0xff]
  %v380 = vld [vmem:[%s4 + $0x20] sm:$0xff]
  %v381 = vld [vmem:[%s4 + $0x28] sm:$0xff]
  %v382 = vld [vmem:[%s4 + $0x30] sm:$0x3]
  %384 = vset.pattern.permute.xlu0 0
  %385 = vperm.xlu0 %384, %v376
  %v386 = vpop.permute.xlu0 %385
  %389 = vset.pattern.permute.xlu0 0
  %390 = vperm.xlu0 %389, %v377
  %v391 = vpop.permute.xlu0 %390
  %394 = vset.pattern.permute.xlu0 0
  %395 = vperm.xlu0 %394, %v378
  %v396 = vpop.permute.xlu0 %395
  %399 = vset.pattern.permute.xlu0 0
  %400 = vperm.xlu0 %399, %v379
  %v401 = vpop.permute.xlu0 %400
  %404 = vset.pattern.permute.xlu0 0
  %405 = vperm.xlu0 %404, %v380
  %v406 = vpop.permute.xlu0 %405
  %409 = vset.pattern.permute.xlu0 0
  %410 = vperm.xlu0 %409, %v381
  %v411 = vpop.permute.xlu0 %410
  %414 = vset.pattern.permute.xlu0 0
  %415 = vperm.xlu0 %414, %v382
  %v416 = vpop.permute.xlu0 %415
  %vm418 = vcmask 818176
  %v420 = vsel %vm418, %v369, 0
  %v423 = vsel %vm418, %v370, 0
  %v426 = vsel %vm418, %v371, 0
  %v429 = vsel %vm418, %v372, 0
  %v432 = vsel %vm418, %v373, 0
  %v435 = vsel %vm418, %v374, 0
  %v438 = vsel %vm418, %v375, 0
  %vm440 = vcmask 1043456
  %v442 = vsel %vm440, %v367, 0
  %v445 = vsel %vm440, %v368, 0
  %447 = vmatpush.msra.mxu0 0.0
  %448 = vmatpush.msra.mxu0 0.0
  %449 = vmatpush.msra.mxu0 0.0
  %450 = vmatpush.msra.mxu0 %v442
  %451 = vmatpush.msra.mxu0 %v365
  %452 = vmatpush.msra.mxu0 %v363
  %453 = vmatpush.msra.mxu0 %v361
  %454 = vmatpush.msra.mxu0 %v359
  %455 = vmatpush.msra.mxu0 %v357
  %456 = vmatpush.msra.mxu0 %v355
  %457 = vmatpush.msra.mxu0 %v353
  %458 = vmatpush.msra.mxu0 %v351
  %459 = vmatpush.msra.mxu0 %v349
  %460 = vmatpush.msra.mxu0 %v347
  %461 = vmatpush.msra.mxu0 %v345
  %462 = vmatpush.msra.mxu0 %v343
  %463 = vmatmul.f32.gmra.mxu0 %v420
  %v464 = vpop.f32.mrf.mxu0
  %v465 = vadd.f32 %v386, %v464
  %466 = vmatmul.f32.gmra.mxu0 %v423
  %v467 = vpop.f32.mrf.mxu0
  %v468 = vadd.f32 %v391, %v467
  %469 = vmatmul.f32.gmra.mxu0 %v426
  %v470 = vpop.f32.mrf.mxu0
  %v471 = vadd.f32 %v396, %v470
  %472 = vmatmul.f32.gmra.mxu0 %v429
  %v473 = vpop.f32.mrf.mxu0
  %v474 = vadd.f32 %v401, %v473
  %475 = vmatmul.f32.gmra.mxu0 %v432
  %v476 = vpop.f32.mrf.mxu0
  %v477 = vadd.f32 %v406, %v476
  %478 = vmatmul.f32.gmra.mxu0 %v435
  %v479 = vpop.f32.mrf.mxu0
  %v480 = vadd.f32 %v411, %v479
  %481 = vmatmul.f32.gmra.mxu0 %v438
  %v482 = vpop.f32.mrf.mxu0
  %v483 = vadd.f32 %v416, %v482
  %484 = vdwg.mxu0
  %485 = vmatpush.msra.mxu0 0.0
  %486 = vmatpush.msra.mxu0 0.0
  %487 = vmatpush.msra.mxu0 0.0
  %488 = vmatpush.msra.mxu0 %v445
  %489 = vmatpush.msra.mxu0 %v366
  %490 = vmatpush.msra.mxu0 %v364
  %491 = vmatpush.msra.mxu0 %v362
  %492 = vmatpush.msra.mxu0 %v360
  %493 = vmatpush.msra.mxu0 %v358
  %494 = vmatpush.msra.mxu0 %v356
  %495 = vmatpush.msra.mxu0 %v354
  %496 = vmatpush.msra.mxu0 %v352
  %497 = vmatpush.msra.mxu0 %v350
  %498 = vmatpush.msra.mxu0 %v348
  %499 = vmatpush.msra.mxu0 %v346
  %500 = vmatpush.msra.mxu0 %v344
  %501 = vmatmul.f32.gmra.mxu0 %v420
  %v502 = vpop.f32.mrf.mxu0
  %v503 = vadd.f32 %v386, %v502
  %504 = vmatmul.f32.gmra.mxu0 %v423
  %v505 = vpop.f32.mrf.mxu0
  %v506 = vadd.f32 %v391, %v505
  %507 = vmatmul.f32.gmra.mxu0 %v426
  %v508 = vpop.f32.mrf.mxu0
  %v509 = vadd.f32 %v396, %v508
  %510 = vmatmul.f32.gmra.mxu0 %v429
  %v511 = vpop.f32.mrf.mxu0
  %v512 = vadd.f32 %v401, %v511
  %513 = vmatmul.f32.gmra.mxu0 %v432
  %v514 = vpop.f32.mrf.mxu0
  %v515 = vadd.f32 %v406, %v514
  %516 = vmatmul.f32.gmra.mxu0 %v435
  %v517 = vpop.f32.mrf.mxu0
  %v518 = vadd.f32 %v411, %v517
  %519 = vmatmul.f32.gmra.mxu0 %v438
  %v520 = vpop.f32.mrf.mxu0
  %v521 = vadd.f32 %v416, %v520
  %522 = vdwg.mxu0
  %vm523 = vcmp.ge.f32.partialorder %v465, 0.0
  %vm524 = vcmp.ge.f32.partialorder %v503, 0.0
  %vm525 = vcmp.ge.f32.partialorder %v468, 0.0
  %vm526 = vcmp.ge.f32.partialorder %v506, 0.0
  %vm527 = vcmp.ge.f32.partialorder %v471, 0.0
  %vm528 = vcmp.ge.f32.partialorder %v509, 0.0
  %vm529 = vcmp.ge.f32.partialorder %v474, 0.0
  %vm530 = vcmp.ge.f32.partialorder %v512, 0.0
  %vm531 = vcmp.ge.f32.partialorder %v477, 0.0
  %vm532 = vcmp.ge.f32.partialorder %v515, 0.0
  %vm533 = vcmp.ge.f32.partialorder %v480, 0.0
  %vm534 = vcmp.ge.f32.partialorder %v518, 0.0
  %vm535 = vcmp.ge.f32.partialorder %v483, 0.0
  %vm536 = vcmp.ge.f32.partialorder %v521, 0.0
  %v537 = vmul.f32 %v465, 0.1
  %v538 = vmul.f32 %v503, 0.1
  %v539 = vmul.f32 %v468, 0.1
  %v540 = vmul.f32 %v506, 0.1
  %v541 = vmul.f32 %v471, 0.1
  %v542 = vmul.f32 %v509, 0.1
  %v543 = vmul.f32 %v474, 0.1
  %v544 = vmul.f32 %v512, 0.1
  %v545 = vmul.f32 %v477, 0.1
  %v546 = vmul.f32 %v515, 0.1
  %v547 = vmul.f32 %v480, 0.1
  %v548 = vmul.f32 %v518, 0.1
  %v549 = vmul.f32 %v483, 0.1
  %v550 = vmul.f32 %v521, 0.1
  %v551 = vsel %vm523, %v465, %v537
  %v552 = vsel %vm524, %v503, %v538
  %v553 = vsel %vm525, %v468, %v539
  %v554 = vsel %vm526, %v506, %v540
  %v555 = vsel %vm527, %v471, %v541
  %v556 = vsel %vm528, %v509, %v542
  %v557 = vsel %vm529, %v474, %v543
  %v558 = vsel %vm530, %v512, %v544
  %v559 = vsel %vm531, %v477, %v545
  %v560 = vsel %vm532, %v515, %v546
  %v561 = vsel %vm533, %v480, %v547
  %v562 = vsel %vm534, %v518, %v548
  %v563 = vsel %vm535, %v483, %v549
  %v564 = vsel %vm536, %v521, %v550
  %v565 = vld [vmem:[%s5] sm:$0xff]
  %v566 = vld [vmem:[%s5 + $0x8] sm:$0xff]
  %v567 = vld [vmem:[%s5 + $0x10] sm:$0xff]
  %v568 = vld [vmem:[%s5 + $0x18] sm:$0x1]
  %v569 = vld [vmem:[%s6] sm:$0xff]
  %v570 = vld [vmem:[%s6 + $0x8] sm:$0xff]
  %v571 = vld [vmem:[%s6 + $0x10] sm:$0xff]
  %v572 = vld [vmem:[%s6 + $0x18] sm:$0x1]
  %574 = vset.pattern.permute.xlu0 0
  %575 = vperm.xlu0 %574, %v569
  %v576 = vpop.permute.xlu0 %575
  %579 = vset.pattern.permute.xlu0 0
  %580 = vperm.xlu0 %579, %v570
  %v581 = vpop.permute.xlu0 %580
  %584 = vset.pattern.permute.xlu0 0
  %585 = vperm.xlu0 %584, %v571
  %v586 = vpop.permute.xlu0 %585
  %589 = vset.pattern.permute.xlu0 0
  %590 = vperm.xlu0 %589, %v572
  %v591 = vpop.permute.xlu0 %590
  %vm593 = vcmask 408576
  %v595 = vsel %vm593, %v565, 0
  %v598 = vsel %vm593, %v566, 0
  %v601 = vsel %vm593, %v567, 0
  %v604 = vsel %vm593, %v568, 0
  %vm606 = vcmask 1041408
  %v608 = vsel %vm606, %v563, 0
  %v611 = vsel %vm606, %v564, 0
  %613 = vmatpush.msra.mxu0 0.0
  %614 = vmatpush.msra.mxu0 0.0
  %615 = vmatpush.msra.mxu0 0.0
  %616 = vmatpush.msra.mxu0 0.0
  %617 = vmatpush.msra.mxu0 0.0
  %618 = vmatpush.msra.mxu0 0.0
  %619 = vmatpush.msra.mxu0 0.0
  %620 = vmatpush.msra.mxu0 0.0
  %621 = vmatpush.msra.mxu0 0.0
  %622 = vmatpush.msra.mxu0 %v608
  %623 = vmatpush.msra.mxu0 %v561
  %624 = vmatpush.msra.mxu0 %v559
  %625 = vmatpush.msra.mxu0 %v557
  %626 = vmatpush.msra.mxu0 %v555
  %627 = vmatpush.msra.mxu0 %v553
  %628 = vmatpush.msra.mxu0 %v551
  %629 = vmatmul.f32.gmra.mxu0 %v595
  %v630 = vpop.f32.mrf.mxu0
  %v631 = vadd.f32 %v576, %v630
  %632 = vmatmul.f32.gmra.mxu0 %v598
  %v633 = vpop.f32.mrf.mxu0
  %v634 = vadd.f32 %v581, %v633
  %635 = vmatmul.f32.gmra.mxu0 %v601
  %v636 = vpop.f32.mrf.mxu0
  %v637 = vadd.f32 %v586, %v636
  %638 = vmatmul.f32.gmra.mxu0 %v604
  %v639 = vpop.f32.mrf.mxu0
  %v640 = vadd.f32 %v591, %v639
  %641 = vdwg.mxu0
  %642 = vmatpush.msra.mxu0 0.0
  %643 = vmatpush.msra.mxu0 0.0
  %644 = vmatpush.msra.mxu0 0.0
  %645 = vmatpush.msra.mxu0 0.0
  %646 = vmatpush.msra.mxu0 0.0
  %647 = vmatpush.msra.mxu0 0.0
  %648 = vmatpush.msra.mxu0 0.0
  %649 = vmatpush.msra.mxu0 0.0
  %650 = vmatpush.msra.mxu0 0.0
  %651 = vmatpush.msra.mxu0 %v611
  %652 = vmatpush.msra.mxu0 %v562
  %653 = vmatpush.msra.mxu0 %v560
  %654 = vmatpush.msra.mxu0 %v558
  %655 = vmatpush.msra.mxu0 %v556
  %656 = vmatpush.msra.mxu0 %v554
  %657 = vmatpush.msra.mxu0 %v552
  %658 = vmatmul.f32.gmra.mxu0 %v595
  %v659 = vpop.f32.mrf.mxu0
  %v660 = vadd.f32 %v576, %v659
  %661 = vmatmul.f32.gmra.mxu0 %v598
  %v662 = vpop.f32.mrf.mxu0
  %v663 = vadd.f32 %v581, %v662
  %664 = vmatmul.f32.gmra.mxu0 %v601
  %v665 = vpop.f32.mrf.mxu0
  %v666 = vadd.f32 %v586, %v665
  %667 = vmatmul.f32.gmra.mxu0 %v604
  %v668 = vpop.f32.mrf.mxu0
  %v669 = vadd.f32 %v591, %v668
  %670 = vdwg.mxu0
  %vm671 = vcmp.ge.f32.partialorder %v631, 0.0
  %vm672 = vcmp.ge.f32.partialorder %v660, 0.0
  %vm673 = vcmp.ge.f32.partialorder %v634, 0.0
  %vm674 = vcmp.ge.f32.partialorder %v663, 0.0
  %vm675 = vcmp.ge.f32.partialorder %v637, 0.0
  %vm676 = vcmp.ge.f32.partialorder %v666, 0.0
  %vm677 = vcmp.ge.f32.partialorder %v640, 0.0
  %vm678 = vcmp.ge.f32.partialorder %v669, 0.0
  %v679 = vmul.f32 %v631, 0.1
  %v680 = vmul.f32 %v660, 0.1
  %v681 = vmul.f32 %v634, 0.1
  %v682 = vmul.f32 %v663, 0.1
  %v683 = vmul.f32 %v637, 0.1
  %v684 = vmul.f32 %v666, 0.1
  %v685 = vmul.f32 %v640, 0.1
  %v686 = vmul.f32 %v669, 0.1
  %v687 = vsel %vm671, %v631, %v679
  %v688 = vsel %vm672, %v660, %v680
  %v689 = vsel %vm673, %v634, %v681
  %v690 = vsel %vm674, %v663, %v682
  %v691 = vsel %vm675, %v637, %v683
  %v692 = vsel %vm676, %v666, %v684
  %v693 = vsel %vm677, %v640, %v685
  %v694 = vsel %vm678, %v669, %v686
  %v695 = vld [vmem:[%s7] sm:$0xff]
  %v696 = vld [vmem:[%s7 + $0x8] sm:$0x3]
  %v697 = vld [vmem:[%s8] sm:$0xff]
  %v698 = vld [vmem:[%s8 + $0x8] sm:$0x3]
  %700 = vset.pattern.permute.xlu0 0
  %701 = vperm.xlu0 %700, %v697
  %v702 = vpop.permute.xlu0 %701
  %705 = vset.pattern.permute.xlu0 0
  %706 = vperm.xlu0 %705, %v698
  %v707 = vpop.permute.xlu0 %706
  %vm709 = vcmask 203776
  %v711 = vsel %vm709, %v695, 0
  %v714 = vsel %vm709, %v696, 0
  %vm716 = vcmask 1040384
  %v718 = vsel %vm716, %v693, 0
  %v721 = vsel %vm716, %v694, 0
  %723 = vmatpush.msra.mxu0 0.0
  %724 = vmatpush.msra.mxu0 0.0
  %725 = vmatpush.msra.mxu0 0.0
  %726 = vmatpush.msra.mxu0 0.0
  %727 = vmatpush.msra.mxu0 0.0
  %728 = vmatpush.msra.mxu0 0.0
  %729 = vmatpush.msra.mxu0 0.0
  %730 = vmatpush.msra.mxu0 0.0
  %731 = vmatpush.msra.mxu0 0.0
  %732 = vmatpush.msra.mxu0 0.0
  %733 = vmatpush.msra.mxu0 0.0
  %734 = vmatpush.msra.mxu0 0.0
  %735 = vmatpush.msra.mxu0 %v718
  %736 = vmatpush.msra.mxu0 %v691
  %737 = vmatpush.msra.mxu0 %v689
  %738 = vmatpush.msra.mxu0 %v687
  %739 = vmatmul.f32.gmra.mxu0 %v711
  %v740 = vpop.f32.mrf.mxu0
  %v741 = vadd.f32 %v702, %v740
  %742 = vmatmul.f32.gmra.mxu0 %v714
  %v743 = vpop.f32.mrf.mxu0
  %v744 = vadd.f32 %v707, %v743
  %745 = vdwg.mxu0
  %746 = vmatpush.msra.mxu0 0.0
  %747 = vmatpush.msra.mxu0 0.0
  %748 = vmatpush.msra.mxu0 0.0
  %749 = vmatpush.msra.mxu0 0.0
  %750 = vmatpush.msra.mxu0 0.0
  %751 = vmatpush.msra.mxu0 0.0
  %752 = vmatpush.msra.mxu0 0.0
  %753 = vmatpush.msra.mxu0 0.0
  %754 = vmatpush.msra.mxu0 0.0
  %755 = vmatpush.msra.mxu0 0.0
  %756 = vmatpush.msra.mxu0 0.0
  %757 = vmatpush.msra.mxu0 0.0
  %758 = vmatpush.msra.mxu0 %v721
  %759 = vmatpush.msra.mxu0 %v692
  %760 = vmatpush.msra.mxu0 %v690
  %761 = vmatpush.msra.mxu0 %v688
  %762 = vmatmul.f32.gmra.mxu0 %v711
  %v763 = vpop.f32.mrf.mxu0
  %v764 = vadd.f32 %v702, %v763
  %765 = vmatmul.f32.gmra.mxu0 %v714
  %v766 = vpop.f32.mrf.mxu0
  %v767 = vadd.f32 %v707, %v766
  %768 = vdwg.mxu0
  %vm769 = vcmp.ge.f32.partialorder %v741, 0.0
  %vm770 = vcmp.ge.f32.partialorder %v764, 0.0
  %vm771 = vcmp.ge.f32.partialorder %v744, 0.0
  %vm772 = vcmp.ge.f32.partialorder %v767, 0.0
  %v773 = vmul.f32 %v741, 0.1
  %v774 = vmul.f32 %v764, 0.1
  %v775 = vmul.f32 %v744, 0.1
  %v776 = vmul.f32 %v767, 0.1
  %v777 = vsel %vm769, %v741, %v773
  %v778 = vsel %vm770, %v764, %v774
  %v779 = vsel %vm771, %v744, %v775
  %v780 = vsel %vm772, %v767, %v776
  %v781 = vld [vmem:[%s9] sm:$0xff]
  %v782 = vld [vmem:[%s9 + $0x8] sm:$0x3]
  %784 = vset.pattern.permute.xlu0 0
  %785 = vperm.xlu0 %784, %v781
  %v786 = vpop.permute.xlu0 %785
  %789 = vset.pattern.permute.xlu0 0
  %790 = vperm.xlu0 %789, %v782
  %v791 = vpop.permute.xlu0 %790
  %v793 = vmul.f32 %v777, %v786
  %v794 = vmul.f32 %v778, %v786
  %v795 = vmul.f32 %v779, %v791
  %v796 = vmul.f32 %v780, %v791
  %v797 = vsel %vm606, %v795, 0.0
  %v798 = vadd.f32 %v793, %v797
  %v799 = vrot.slane %v798, 4
  %v800 = vadd.f32 %v798, %v799
  %v801 = vrot.slane %v800, 2
  %v802 = vadd.f32 %v800, %v801
  %v803 = vrot.slane %v802, 1
  %v804 = vadd.f32 %v802, %v803
  %v805 = vsel %vm606, %v796, 0.0
  %v806 = vadd.f32 %v794, %v805
  %v807 = vrot.slane %v806, 4
  %v808 = vadd.f32 %v806, %v807
  %v809 = vrot.slane %v808, 2
  %v810 = vadd.f32 %v808, %v809
  %v811 = vrot.slane %v810, 1
  %v812 = vadd.f32 %v810, %v811
  %v813 = vld [vmem:[#allocation2] sm:$0x1]
  %815 = vset.pattern.permute.xlu0 0
  %816 = vperm.xlu0 %815, %v813
  %v817 = vpop.permute.xlu0 %816
  %v819 = vperm.slane %v817, 0
  %v820 = vadd.f32 %v804, %v819
  %v821 = vadd.f32 %v812, %v819
  %vm822 = vcmp.ge.f32.partialorder %v820, 0.0
  %vm823 = vcmp.ge.f32.partialorder %v821, 0.0
  %v824 = vmul.f32 %v820, 0.1
  %v825 = vmul.f32 %v821, 0.1
  %v826 = vsel %vm822, %v820, %v824
  %v827 = vsel %vm823, %v821, %v825
  %v830 = vrot.slane %v827, 7
  %v831 = vsel %vm716, %v826, %v830
  %v833 = vlaneseq
  %vm834 = vcmp.ge.s32.totalorder %v833, 0
  %vm835 = vcmp.lt.s32.totalorder %v833, 256
  %vm836 = vmand %vm834, %vm835
  %837 = vst.msk [vmem:[%s11] sm:$0x3] %vm836, %v831
  // Predicated region
  $region46: #{large_block_forward.1} parent=0 // pred_check
    _
  $region47: #{large_block_forward.1} parent=0 // pred_check_branch
    %839 = sbr.rel (0) target = $region49
  $region48: #{large_block_forward.1} parent=0 // pred_region
    _
  $region49: #{large_block_forward.1} parent=0 // pred_fallthru
    _
  // Predicated region
  $region50: #{large_block_forward.1} parent=0 // pred_check
    _
  $region51: #{large_block_forward.1} parent=0 // pred_check_branch
    %841 = sbr.rel (0) target = $region53
  $region52: #{large_block_forward.1} parent=0 // pred_region
    _
  $region53: #{large_block_forward.1} parent=0 // pred_fallthru
    _

</llo_original>
